<compile_context>
chip_gen: v7x
topology: tpu7x:2x2x1
jax: 0.10.0
libtpu: 0.0.40
codegen_flags: <defaults>
</compile_context>

<pallas_src>
import functools

import numpy as np
import jax
import jax.numpy as jnp
from jax import lax
from jax.experimental import pallas as pl
from jax.experimental.pallas import tpu as pltpu

# Mirrors the module-level global used by the training script.
GAUSSIAN_FILTER = True

_PRED_TILE = 16384   # lanes/grid-step for kernels that stream the (20, N) pred
_AUX_TILE = 65536    # lanes/grid-step for the ~16 B/voxel aux loss kernel


def _round_up(x, m):
    return ((x + m - 1) // m) * m


def _vmem_limit_bytes():
    """VMEM budget: <= 3/4 of physical, capped at 64 MiB (=> 48 MiB on v7x)."""
    cap = 128 * 1024 * 1024
    try:
        cap = int(pltpu.get_tpu_info().vmem_capacity_bytes)
    except Exception:
        pass
    return int(min(64 * 1024 * 1024, (cap * 3) // 4))


# --------------------------------------------------------------------------
# Deterministic Gaussian taps: the 1-D impulse response of
# scipy.ndimage.gaussian_filter(sigma=1) on a length-7 delta (reflect
# boundary).  The 7x7x7 Conv3d weight of GaussianLayer_3D is exactly the
# separable outer product f (x) f (x) f of this response.
# TODO(synk): validate numerically against the actual Conv3d weights.
# --------------------------------------------------------------------------
def _gaussian1d_taps():
    sigma, radius = 1.0, 4
    x = np.arange(-radius, radius + 1, dtype=np.float64)
    g = np.exp(-0.5 * (x / sigma) ** 2)
    g /= g.sum()
    d = np.zeros(7, dtype=np.float64)
    d[3] = 1.0
    dp = np.pad(d, radius, mode="symmetric")      # scipy 'reflect' == np 'symmetric'
    f = np.correlate(dp, g, mode="valid")         # length-7 1-D impulse response
    return tuple(float(v) for v in f)


# Degree-4 polynomial fit of exp() on [0, 1]: the reward's 19 exp/voxel run
# on the VPU instead of the single EUP slot (clamped softmax => domain [0,1]).
def _exp01_poly_coeffs(deg=4):
    x = np.linspace(0.0, 1.0, 4097)
    c = np.polyfit(x, np.exp(x), deg)             # highest power first
    return tuple(float(v) for v in c)


_EXP01_COEFFS = _exp01_poly_coeffs()


def _exp01(p):
    c = _EXP01_COEFFS
    r = c[0] * p + c[1]
    for k in c[2:]:
        r = r * p + k
    return r


# --------------------------------------------------------------------------
# Shared in-kernel math on a (C, TILE) tile
# --------------------------------------------------------------------------
def _exact_recip(x):
    # approx EUP reciprocal + one Newton step -> ~full f32 precision.
    r = pl.reciprocal(x, approx=True)
    return r * (2.0 - x * r)


def _softmax_clamped(x):
    # x: (C, TILE) f32 logits -> clamped softmax probabilities
    m = jnp.max(x, axis=0, keepdims=True)
    e = jnp.exp(x - m)
    s = jnp.sum(e, axis=0, keepdims=True)
    return jnp.maximum(e * _exact_recip(s), 1e-7)


def _reward_from_prob(prob):
    # logsumexp over the 19 "true" channels (all but channel 5), squared.
    ep = _exp01(prob)                                        # polynomial exp (VPU)
    se = (jnp.sum(ep[:5, :], axis=0, keepdims=True)
          + jnp.sum(ep[6:, :], axis=0, keepdims=True))
    lse = jnp.log(se)
    return lse * lse


def _gather_true_pred(prob, t):
    # torch.gather(true_pred, shifted_targets) with true_pred = prob minus ch 5
    C, TN = prob.shape
    st = t - (t > 5).astype(jnp.int32)                       # shifted_targets
    idx2 = st + (st >= 5).astype(jnp.int32)                  # back to 20-ch index
    ch = lax.broadcasted_iota(jnp.int32, (C, TN), 0)
    return jnp.sum(jnp.where(ch == idx2, prob, 0.0), axis=0, keepdims=True)


# --------------------------------------------------------------------------
# Kernel A (pass 1): reward = logsumexp(19 clamped probs)^2, and (optionally)
# prob[5] and the target-gathered probability so the ws=False loss pass never
# re-reads pred.
# --------------------------------------------------------------------------
def _reward_kernel(*refs, emit_aux):
    if emit_aux:
        pred_ref, tgt_ref, reward_ref, p5_ref, gat_ref = refs
    else:
        pred_ref, reward_ref = refs
    x = pred_ref[...].astype(jnp.float32)                    # (C, TILE)
    prob = _softmax_clamped(x)
    reward_ref[...] = _reward_from_prob(prob)
    if emit_aux:
        p5_ref[...] = prob[5:6, :]
        gat_ref[...] = _gather_true_pred(prob, tgt_ref[...])


# --------------------------------------------------------------------------
# Kernel B: separable Gaussian Conv3d(1, 1, 7, padding='same', bias=False).
# Zero padding lives in a VMEM scratch (halo slabs only); passes run
# D (cheap) -> H (sublane) -> W (lane, on the smallest intermediate).
# TODO(synk): D-tile with a 3-slab halo DMA and a lane-dense
# (largest-axis-last) layout / pltpu.roll or MXU banded matmul for the lane
# pass, for volumes too large for whole-volume VMEM residence.
# --------------------------------------------------------------------------
def _gauss3d_sep_kernel(r_ref, out_ref, xp_ref, *, taps):
    D, H, W = out_ref.shape
    Dp, Hp, Wp = D + 6, H + 6, W + 6
    # zero only the 6 halo slabs of the padded scratch
    xp_ref[0:3, :, :] = jnp.zeros((3, Hp, Wp), jnp.float32)
    xp_ref[D + 3:Dp, :, :] = jnp.zeros((3, Hp, Wp), jnp.float32)
    xp_ref[:, 0:3, :] = jnp.zeros((Dp, 3, Wp), jnp.float32)
    xp_ref[:, H + 3:Hp, :] = jnp.zeros((Dp, 3, Wp), jnp.float32)
    xp_ref[:, :, 0:3] = jnp.zeros((Dp, Hp, 3), jnp.float32)
    xp_ref[:, :, W + 3:Wp] = jnp.zeros((Dp, Hp, 3), jnp.float32)
    xp_ref[3:3 + D, 3:3 + H, 3:3 + W] = r_ref[...].astype(jnp.float32)
    xp = xp_ref[...]                                         # (Dp, Hp, Wp)

    # D pass (outer-dim slices, cheapest)
    y = taps[0] * xp[0:D, :, :]
    for i in range(1, 7):
        y = y + taps[i] * xp[i:i + D, :, :]                  # (D, Hp, Wp)
    # H pass (sublane)
    z = taps[0] * y[:, 0:H, :]
    for j in range(1, 7):
        z = z + taps[j] * y[:, j:j + H, :]                   # (D, H, Wp)
    # W pass (lane) on the smallest intermediate
    o = taps[0] * z[:, :, 0:W]
    for l in range(1, 7):
        o = o + taps[l] * z[:, :, l:l + W]                   # (D, H, W)
    out_ref[...] = o


# --------------------------------------------------------------------------
# Index-map helpers for the (batch, core, tile) loss grids.
# --------------------------------------------------------------------------
def _vox3_index_map(n_tiles, tiles_per_core):
    def imap(b, c, i):
        return (b, 0, jnp.minimum(c * tiles_per_core + i, n_tiles - 1))
    return imap


def _scalar_index_map(b, c, i):
    return (b * 2 + c, 0)


# --------------------------------------------------------------------------
# Kernel C (ws=False, Gaussian): consumes {reward_g, prob5, gathered, tgt}
# (~16 B/voxel) -- no pred re-read, no softmax.
# --------------------------------------------------------------------------
def _loss_in_aux_kernel(rwd_ref, p5_ref, gat_ref, tgt_ref, sum_ref, cnt_ref,
                        *, n_vox, tile, tiles_per_core):
    step = pl.program_id(2)

    @pl.when(step == 0)
    def _():
        sum_ref[0, 0] = jnp.float32(0.0)
        cnt_ref[0, 0] = jnp.float32(0.0)

    tile_idx = pl.program_id(1) * tiles_per_core + step
    t = tgt_ref[0]                                           # (1, TILE) int32
    lane = lax.broadcasted_iota(jnp.int32, t.shape, 1)
    in_bounds = (tile_idx * tile + lane) < n_vox

    res = p5_ref[0] * pl.reciprocal(rwd_ref[0], approx=True)  # reservation/reward
    gl = gat_ref[0] + res
    valid = jnp.logical_and(t != 0, in_bounds)
    log_gl = jnp.log(jnp.where(valid, gl, 1.0))
    sum_ref[0, 0] += jnp.sum(jnp.where(valid, log_gl, 0.0))
    cnt_ref[0, 0] += jnp.sum(valid.astype(jnp.float32))


# --------------------------------------------------------------------------
# Kernel C' (ws=False, no Gaussian): fully fused softmax + reward + gather.
# --------------------------------------------------------------------------
def _loss_in_fused_kernel(pred_ref, tgt_ref, sum_ref, cnt_ref,
                          *, n_vox, tile, tiles_per_core):
    step = pl.program_id(2)

    @pl.when(step == 0)
    def _():
        sum_ref[0, 0] = jnp.float32(0.0)
        cnt_ref[0, 0] = jnp.float32(0.0)

    tile_idx = pl.program_id(1) * tiles_per_core + step
    x = pred_ref[0].astype(jnp.float32)                      # (C, TILE)
    prob = _softmax_clamped(x)
    rwd = _reward_from_prob(prob)
    t = tgt_ref[0]

    lane = lax.broadcasted_iota(jnp.int32, t.shape, 1)
    in_bounds = (tile_idx * tile + lane) < n_vox

    res = prob[5:6, :] * pl.reciprocal(rwd, approx=True)
    gl = _gather_true_pred(prob, t) + res
    valid = jnp.logical_and(t != 0, in_bounds)
    log_gl = jnp.log(jnp.where(valid, gl, 1.0))
    sum_ref[0, 0] += jnp.sum(jnp.where(valid, log_gl, 0.0))
    cnt_ref[0, 0] += jnp.sum(valid.astype(jnp.float32))


# --------------------------------------------------------------------------
# Kernel D (ws=True): adds the OOD "reserve boosting" term over the 19 true
# channels at voxels with target == 5 (grouped log-products).
# --------------------------------------------------------------------------
def _loss_wrong_kernel(*refs, n_vox, tile, tiles_per_core, ood_reg,
                       use_reward_input):
    if use_reward_input:
        (pred_ref, rwd_ref, tgt_ref,
         in_sum_ref, in_cnt_ref, out_sum_ref, out_cnt_ref) = refs
    else:
        (pred_ref, tgt_ref,
         in_sum_ref, in_cnt_ref, out_sum_ref, out_cnt_ref) = refs

    step = pl.program_id(2)

    @pl.when(step == 0)
    def _():
        in_sum_ref[0, 0] = jnp.float32(0.0)
        in_cnt_ref[0, 0] = jnp.float32(0.0)
        out_sum_ref[0, 0] = jnp.float32(0.0)
        out_cnt_ref[0, 0] = jnp.float32(0.0)

    tile_idx = pl.program_id(1) * tiles_per_core + step
    x = pred_ref[0].astype(jnp.float32)                      # (C, TILE)
    C, TN = x.shape
    prob = _softmax_clamped(x)
    rwd = rwd_ref[0] if use_reward_input else _reward_from_prob(prob)
    t = tgt_ref[0]

    lane = lax.broadcasted_iota(jnp.int32, t.shape, 1)
    in_bounds = (tile_idx * tile + lane) < n_vox

    res = prob[5:6, :] * pl.reciprocal(rwd, approx=True)
    mask5 = jnp.logical_and(t == 5, in_bounds)

    # OOD term: ood_reg * mean over 19 channels x (t==5) voxels of
    # log(clamp(prob_c + res, 1e-7)).  Grouped log-products: products of <=5
    # clamped energies stay >= 1e-35 (> f32 normal floor) -> 4 logs/voxel.
    ch = lax.broadcasted_iota(jnp.int32, (C, TN), 0)
    energy = jnp.where(ch == 5, 1.0, jnp.maximum(prob + res, 1e-7))
    per_vox = jnp.zeros_like(res)
    for g in range(4):
        grp = energy[5 * g:5 * (g + 1), :]
        p = grp[0:1, :] * grp[1:2, :] * grp[2:3, :] * grp[3:4, :] * grp[4:5, :]
        per_vox = per_vox + jnp.log(jnp.where(mask5, p, 1.0))
    out_sum_ref[0, 0] += ood_reg * jnp.sum(per_vox)
    out_cnt_ref[0, 0] += 19.0 * jnp.sum(mask5.astype(jnp.float32))

    # in-distribution term: gather(true_pred, shifted_targets) + reservation
    t2 = jnp.where(t == 5, 0, t)                             # targets[mask]=0
    gl = _gather_true_pred(prob, t2) + res
    valid = jnp.logical_and(jnp.logical_and(t != 5, t != 0), in_bounds)
    log_gl = jnp.log(jnp.where(valid, gl, 1.0))
    in_sum_ref[0, 0] += jnp.sum(jnp.where(valid, log_gl, 0.0))
    in_cnt_ref[0, 0] += jnp.sum(valid.astype(jnp.float32))


# --------------------------------------------------------------------------
# Wrapper
# --------------------------------------------------------------------------
class GamblerPallas:
    def __init__(self, reward, pretrain=-1, ood_reg=0.1,
                 use_gaussian_filter=None, tile_n=None):
        self.reward = float(reward)          # empty-input fallback (unused here)
        self.pretrain = pretrain
        self.ood_reg = float(ood_reg)
        self.use_gaussian = (GAUSSIAN_FILTER if use_gaussian_filter is None
                             else use_gaussian_filter)
        self.tile_n = tile_n
        self.taps = _gaussian1d_taps()
        self.vmem_limit = _vmem_limit_bytes()

    def _tile(self, n, default):
        t = self.tile_n if self.tile_n is not None else default
        t = max(128, min(t, _round_up(n, 128)))
        return _round_up(t, 128)

    def __call__(self, pred, targets, wrong_sample=False):
        B, C, D, H, W = pred.shape
        assert C == 20, "Gambler assumes 20 classes (channel 5 = reservation)"
        M = D * H * W
        pred3 = pred.reshape(B, C, M)                        # free reshape, no transpose
        tgt3 = targets.reshape(B, 1, M).astype(jnp.int32)

        vlim = self.vmem_limit
        cp_map = pltpu.CompilerParams(dimension_semantics=("parallel",),
                                      vmem_limit_bytes=vlim)
        cp_red = pltpu.CompilerParams(
            dimension_semantics=("parallel", "parallel", "arbitrary"),
            vmem_limit_bytes=vlim)

        # ---- pass 1 (+ separable Gaussian conv) when the filter is on ----
        reward_g3 = prob5_3 = gath3 = None
        if self.use_gaussian:
            assert B == 1, "GaussianLayer_3D path requires batch size 1 (Conv3d(1,1,...))"
            tn1 = self._tile(M, _PRED_TILE)
            nt1 = pl.cdiv(M, tn1)
            pred2 = pred3.reshape(C, M)
            pred_spec = pl.BlockSpec((C, tn1), lambda i: (0, i))
            vox_spec = pl.BlockSpec((1, tn1), lambda i: (0, i))
            emit_aux = not wrong_sample
            if emit_aux:
                reward_raw, prob5, gathered = pl.pallas_call(
                    functools.partial(_reward_kernel, emit_aux=True),
                    out_shape=tuple(jax.ShapeDtypeStruct((1, M), jnp.float32)
                                    for _ in range(3)),
                    grid=(nt1,),
                    in_specs=[pred_spec, vox_spec],
                    out_specs=(vox_spec, vox_spec, vox_spec),
                    compiler_params=cp_map,
                )(pred2, tgt3.reshape(1, M))
                prob5_3 = prob5.reshape(1, 1, M)
                gath3 = gathered.reshape(1, 1, M)
            else:
                reward_raw = pl.pallas_call(
                    functools.partial(_reward_kernel, emit_aux=False),
                    out_shape=jax.ShapeDtypeStruct((1, M), jnp.float32),
                    grid=(nt1,),
                    in_specs=[pred_spec],
                    out_specs=vox_spec,
                    compiler_params=cp_map,
                )(pred2)

            pad_bytes = 4 * (D + 6) * (H + 6) * (W + 6)
            if 4 * pad_bytes > vlim:
                # TODO(synk): D-tile the conv with a 3-slab halo DMA for large volumes.
                raise NotImplementedError("Gaussian conv volume too large for VMEM")
            reward_g3 = pl.pallas_call(
                functools.partial(_gauss3d_sep_kernel, taps=self.taps),
                out_shape=jax.ShapeDtypeStruct((D, H, W), jnp.float32),
                in_specs=[pl.BlockSpec(memory_space=pltpu.MemorySpace.VMEM)],
                out_specs=pl.BlockSpec(memory_space=pltpu.MemorySpace.VMEM),
                scratch_shapes=[pltpu.VMEM((D + 6, H + 6, W + 6), jnp.float32)],
                compiler_params=pltpu.CompilerParams(vmem_limit_bytes=vlim),
            )(reward_raw.reshape(D, H, W)).reshape(1, 1, M)

        smem_spec = pl.BlockSpec((1, 1), _scalar_index_map,
                                 memory_space=pltpu.MemorySpace.SMEM)

        if not wrong_sample:
            if self.use_gaussian:
                tn = self._tile(M, _AUX_TILE)
                nt = pl.cdiv(M, tn)
                tpc = pl.cdiv(nt, 2)
                vspec = pl.BlockSpec((1, 1, tn), _vox3_index_map(nt, tpc))
                s, c = pl.pallas_call(
                    functools.partial(_loss_in_aux_kernel, n_vox=M, tile=tn,
                                      tiles_per_core=tpc),
                    out_shape=(jax.ShapeDtypeStruct((2 * B, 1), jnp.float32),) * 2,
                    grid=(B, 2, tpc),
                    in_specs=[vspec, vspec, vspec, vspec],
                    out_specs=(smem_spec, smem_spec),
                    compiler_params=cp_red,
                )(reward_g3, prob5_3, gath3, tgt3)
            else:
                tn = self._tile(M, _PRED_TILE)
                nt = pl.cdiv(M, tn)
                tpc = pl.cdiv(nt, 2)
                imap = _vox3_index_map(nt, tpc)
                s, c = pl.pallas_call(
                    functools.partial(_loss_in_fused_kernel, n_vox=M, tile=tn,
                                      tiles_per_core=tpc),
                    out_shape=(jax.ShapeDtypeStruct((2 * B, 1), jnp.float32),) * 2,
                    grid=(B, 2, tpc),
                    in_specs=[pl.BlockSpec((1, C, tn), imap),
                              pl.BlockSpec((1, 1, tn), imap)],
                    out_specs=(smem_spec, smem_spec),
                    compiler_params=cp_red,
                )(pred3, tgt3)
            return -(jnp.sum(s) / jnp.sum(c))

        # wrong_sample=True
        tn = self._tile(M, _PRED_TILE)
        nt = pl.cdiv(M, tn)
        tpc = pl.cdiv(nt, 2)
        imap = _vox3_index_map(nt, tpc)
        in_specs = [pl.BlockSpec((1, C, tn), imap)]
        operands = [pred3]
        if self.use_gaussian:
            in_specs.append(pl.BlockSpec((1, 1, tn), imap))
            operands.append(reward_g3)
        in_specs.append(pl.BlockSpec((1, 1, tn), imap))
        operands.append(tgt3)
        in_s, in_c, out_s, out_c = pl.pallas_call(
            functools.partial(_loss_wrong_kernel, n_vox=M, tile=tn,
                              tiles_per_core=tpc, ood_reg=self.ood_reg,
                              use_reward_input=self.use_gaussian),
            out_shape=(jax.ShapeDtypeStruct((2 * B, 1), jnp.float32),) * 4,
            grid=(B, 2, tpc),
            in_specs=in_specs,
            out_specs=(smem_spec,) * 4,
            compiler_params=cp_red,
        )(*operands)
        gin = jnp.sum(in_s) / jnp.sum(in_c)
        cnt5 = jnp.sum(out_c)
        # torch returns tensor([0.0]).mean() when no voxel has target == 5
        gout = jnp.where(cnt5 > 0.0, jnp.sum(out_s) / cnt5, 0.0)
        return -(gin + gout)


# --------------------------------------------------------------------------
# Pure-JAX reference (optionally with the Gaussian-filtered reward) used for
# a numeric cross-check of the Pallas kernels.
# --------------------------------------------------------------------------
def _reference_loss(pred, targets, ood_reg, wrong_sample, taps=None):
    prob = jnp.maximum(jax.nn.softmax(pred.astype(jnp.float32), axis=1), 1e-7)
    true_pred = jnp.concatenate([prob[:, :5], prob[:, 6:]], axis=1)
    reservation = prob[:, 5]
    reward = jnp.log(jnp.sum(jnp.exp(true_pred), axis=1)) ** 2      # (B,D,H,W)
    if taps is not None:
        t = jnp.asarray(taps, jnp.float32)
        w3 = (t[:, None, None] * t[None, :, None] * t[None, None, :])[None, None]
        reward = lax.conv_general_dilated(reward[:, None], w3, (1, 1, 1),
                                          [(3, 3), (3, 3), (3, 3)])[:, 0]
    reservation = reservation / reward
    if not wrong_sample:
        mask = targets == 0
        shifted = targets - (targets > 5).astype(jnp.int32)
        gathered = jnp.take_along_axis(true_pred, shifted[:, None], axis=1)[:, 0]
        gl = gathered + reservation
        valid = jnp.logical_not(mask)
        s = jnp.sum(jnp.where(valid, jnp.log(jnp.where(valid, gl, 1.0)), 0.0))
        return -(s / jnp.sum(valid.astype(jnp.float32)))
    else:
        mask = targets == 5
        void = targets == 0
        energy = jnp.maximum(true_pred + reservation[:, None], 1e-7)
        out_mask = jnp.broadcast_to(mask[:, None], energy.shape)
        out_cnt = jnp.sum(out_mask.astype(jnp.float32))
        out_sum = ood_reg * jnp.sum(jnp.where(out_mask, jnp.log(energy), 0.0))
        gout = jnp.where(out_cnt > 0, out_sum / out_cnt, 0.0)
        t2 = jnp.where(mask, 0, targets)
        shifted = t2 - (t2 > 5).astype(jnp.int32)
        gathered = jnp.take_along_axis(true_pred, shifted[:, None], axis=1)[:, 0]
        gl = gathered + reservation
        valid = jnp.logical_and(jnp.logical_not(mask), jnp.logical_not(void))
        gin = (jnp.sum(jnp.where(valid, jnp.log(jnp.where(valid, gl, 1.0)), 0.0))
               / jnp.sum(valid.astype(jnp.float32)))
        return -(gin + gout)


if __name__ == "__main__":
    key = jax.random.PRNGKey(0)
    k1, k2 = jax.random.split(key)
    B, C, D, H, W = 1, 20, 16, 16, 16          # 20 classes, class 5 = OOD/reservation
    pred = jax.random.normal(k1, (B, C, D, H, W), dtype=jnp.float32)
    targets = jax.random.randint(k2, (B, D, H, W), 0, C, dtype=jnp.int32)
    taps = _gaussian1d_taps()

    # Gaussian-filtered reward path (default).  tile_n=512 -> 8 voxel tiles,
    # 4 steps per core, exercising the pipelined megacore accumulation.
    gambler = GamblerPallas(reward=4.5, ood_reg=0.1, tile_n=512)
    for ws in (False, True):
        got = jax.block_until_ready(gambler(pred, targets, wrong_sample=ws))
        want = jax.block_until_ready(_reference_loss(pred, targets, 0.1, ws, taps=taps))
        assert got.shape == () and bool(jnp.isfinite(got))
        np.testing.assert_allclose(np.asarray(got), np.asarray(want),
                                   rtol=1e-2, atol=1e-3)

    # Default (large) tiles: single-tile grid with the size-2 core axis.
    gambler_d = GamblerPallas(reward=4.5, ood_reg=0.1)
    jax.block_until_ready(gambler_d(pred, targets, wrong_sample=False))

    # Fully fused path (no Gaussian filter), cross-checked against pure JAX.
    # tile_n=640 -> odd tile count + partial last tile (clamped index map and
    # in-kernel lane masking both exercised).
    gambler_ng = GamblerPallas(reward=4.5, ood_reg=0.1,
                               use_gaussian_filter=False, tile_n=640)
    for ws in (False, True):
        got = jax.block_until_ready(gambler_ng(pred, targets, wrong_sample=ws))
        want = jax.block_until_ready(_reference_loss(pred, targets, 0.1, ws))
        np.testing.assert_allclose(np.asarray(got), np.asarray(want),
                                   rtol=1e-2, atol=1e-3)

    print("KERNEL_OK")
</pallas_src>

<mosaic_0001>
module attributes {stable_mosaic.version = 11 : i64} {
  func.func @_reward_kernel(%arg0: i32, %arg1: memref<20x512xf32, #tpu.memory_space<vmem>>, %arg2: memref<1x512xi32, #tpu.memory_space<vmem>>, %arg3: memref<1x512xf32, #tpu.memory_space<vmem>>, %arg4: memref<1x512xf32, #tpu.memory_space<vmem>>, %arg5: memref<1x512xf32, #tpu.memory_space<vmem>>) attributes {dimension_semantics = [#tpu.dimension_semantics<parallel>], iteration_bounds = array<i64: 8>, scalar_prefetch = 0 : i64, scratch_operands = 0 : i64, tpu.core_type = #tpu.core_type<tc>, window_params = [{transform_indices = @transform_0, window_bounds = array<i64: 20, 512>}, {transform_indices = @transform_1, window_bounds = array<i64: 1, 512>}, {transform_indices = @transform_2, window_bounds = array<i64: 1, 512>}, {transform_indices = @transform_3, window_bounds = array<i64: 1, 512>}, {transform_indices = @transform_4, window_bounds = array<i64: 1, 512>}]} {
    %c0 = arith.constant 0 : index
    %c0_0 = arith.constant 0 : index
    %0 = vector.load %arg1[%c0, %c0_0] : memref<20x512xf32, #tpu.memory_space<vmem>>, vector<20x512xf32>
    %cst = arith.constant dense<0xFF800000> : vector<512xf32>
    %1 = vector.multi_reduction <maximumf>, %0, %cst [0] : vector<20x512xf32> to vector<512xf32>
    %2 = vector.shape_cast %1 : vector<512xf32> to vector<1x512xf32>
    %3 = vector.broadcast %2 : vector<1x512xf32> to vector<20x512xf32>
    %4 = arith.subf %0, %3 : vector<20x512xf32>
    %5 = math.exp %4 : vector<20x512xf32>
    %cst_1 = arith.constant dense<0.000000e+00> : vector<512xf32>
    %6 = vector.multi_reduction <add>, %5, %cst_1 [0] : vector<20x512xf32> to vector<512xf32>
    %7 = vector.shape_cast %6 : vector<512xf32> to vector<1x512xf32>
    %8 = tpu.reciprocal %7 {approx = true} : vector<1x512xf32> -> vector<1x512xf32>
    %9 = arith.mulf %7, %8 : vector<1x512xf32>
    %cst_2 = arith.constant 2.000000e+00 : f32
    %10 = vector.broadcast %cst_2 : f32 to vector<1x512xf32>
    %11 = arith.subf %10, %9 : vector<1x512xf32>
    %12 = arith.mulf %8, %11 : vector<1x512xf32>
    %13 = vector.broadcast %12 : vector<1x512xf32> to vector<20x512xf32>
    %14 = arith.mulf %5, %13 : vector<20x512xf32>
    %cst_3 = arith.constant 1.000000e-07 : f32
    %15 = vector.broadcast %cst_3 : f32 to vector<20x512xf32>
    %16 = arith.maximumf %14, %15 : vector<20x512xf32>
    %cst_4 = arith.constant 0.0694815144 : f32
    %17 = vector.broadcast %cst_4 : f32 to vector<20x512xf32>
    %18 = arith.mulf %17, %16 : vector<20x512xf32>
    %cst_5 = arith.constant 0.139663979 : f32
    %19 = vector.broadcast %cst_5 : f32 to vector<20x512xf32>
    %20 = arith.addf %18, %19 : vector<20x512xf32>
    %21 = arith.mulf %20, %16 : vector<20x512xf32>
    %cst_6 = arith.constant 0.510576844 : f32
    %22 = vector.broadcast %cst_6 : f32 to vector<20x512xf32>
    %23 = arith.addf %21, %22 : vector<20x512xf32>
    %24 = arith.mulf %23, %16 : vector<20x512xf32>
    %cst_7 = arith.constant 0.998449444 : f32
    %25 = vector.broadcast %cst_7 : f32 to vector<20x512xf32>
    %26 = arith.addf %24, %25 : vector<20x512xf32>
    %27 = arith.mulf %26, %16 : vector<20x512xf32>
    %cst_8 = arith.constant 1.00005257 : f32
    %28 = vector.broadcast %cst_8 : f32 to vector<20x512xf32>
    %29 = arith.addf %27, %28 : vector<20x512xf32>
    %30 = vector.extract_strided_slice %29 {offsets = [0, 0], sizes = [5, 512], strides = [1, 1]} : vector<20x512xf32> to vector<5x512xf32>
    %cst_9 = arith.constant dense<0.000000e+00> : vector<512xf32>
    %31 = vector.multi_reduction <add>, %30, %cst_9 [0] : vector<5x512xf32> to vector<512xf32>
    %32 = vector.shape_cast %31 : vector<512xf32> to vector<1x512xf32>
    %33 = vector.extract_strided_slice %29 {offsets = [6, 0], sizes = [14, 512], strides = [1, 1]} : vector<20x512xf32> to vector<14x512xf32>
    %cst_10 = arith.constant dense<0.000000e+00> : vector<512xf32>
    %34 = vector.multi_reduction <add>, %33, %cst_10 [0] : vector<14x512xf32> to vector<512xf32>
    %35 = vector.shape_cast %34 : vector<512xf32> to vector<1x512xf32>
    %36 = arith.addf %32, %35 : vector<1x512xf32>
    %37 = math.log %36 : vector<1x512xf32>
    %38 = arith.mulf %37, %37 : vector<1x512xf32>
    %c0_11 = arith.constant 0 : index
    %c0_12 = arith.constant 0 : index
    %39 = vector.load %arg3[%c0_11, %c0_12] : memref<1x512xf32, #tpu.memory_space<vmem>>, vector<1x512xf32>
    tpu.vector_store %arg3[%c0_11, %c0_12], %38 {strides = array<i32>} : memref<1x512xf32, #tpu.memory_space<vmem>>, vector<1x512xf32>,
    %40 = vector.extract_strided_slice %16 {offsets = [5, 0], sizes = [1, 512], strides = [1, 1]} : vector<20x512xf32> to vector<1x512xf32>
    %c0_13 = arith.constant 0 : index
    %c0_14 = arith.constant 0 : index
    %41 = vector.load %arg4[%c0_13, %c0_14] : memref<1x512xf32, #tpu.memory_space<vmem>>, vector<1x512xf32>
    tpu.vector_store %arg4[%c0_13, %c0_14], %40 {strides = array<i32>} : memref<1x512xf32, #tpu.memory_space<vmem>>, vector<1x512xf32>,
    %c0_15 = arith.constant 0 : index
    %c0_16 = arith.constant 0 : index
    %42 = vector.load %arg2[%c0_15, %c0_16] : memref<1x512xi32, #tpu.memory_space<vmem>>, vector<1x512xi32>
    %c5_i32 = arith.constant 5 : i32
    %43 = vector.broadcast %c5_i32 : i32 to vector<1x512xi32>
    %44 = arith.cmpi sgt, %42, %43 : vector<1x512xi32>
    %45 = arith.extui %44 : vector<1x512xi1> to vector<1x512xi32>
    %46 = arith.subi %42, %45 : vector<1x512xi32>
    %c5_i32_17 = arith.constant 5 : i32
    %47 = vector.broadcast %c5_i32_17 : i32 to vector<1x512xi32>
    %48 = arith.cmpi sge, %46, %47 : vector<1x512xi32>
    %49 = arith.extui %48 : vector<1x512xi1> to vector<1x512xi32>
    %50 = arith.addi %46, %49 : vector<1x512xi32>
    %51 = tpu.iota {dimensions = array<i32: 0>} : vector<20x512xi32>
    %52 = vector.broadcast %50 : vector<1x512xi32> to vector<20x512xi32>
    %53 = arith.cmpi eq, %51, %52 : vector<20x512xi32>
    %cst_18 = arith.constant 0.000000e+00 : f32
    %54 = vector.broadcast %cst_18 : f32 to vector<20x512xf32>
    %55 = arith.select %53, %16, %54 : vector<20x512xi1>, vector<20x512xf32>
    %cst_19 = arith.constant dense<0.000000e+00> : vector<512xf32>
    %56 = vector.multi_reduction <add>, %55, %cst_19 [0] : vector<20x512xf32> to vector<512xf32>
    %57 = vector.shape_cast %56 : vector<512xf32> to vector<1x512xf32>
    %c0_20 = arith.constant 0 : index
    %c0_21 = arith.constant 0 : index
    %58 = vector.load %arg5[%c0_20, %c0_21] : memref<1x512xf32, #tpu.memory_space<vmem>>, vector<1x512xf32>
    tpu.vector_store %arg5[%c0_20, %c0_21], %57 {strides = array<i32>} : memref<1x512xf32, #tpu.memory_space<vmem>>, vector<1x512xf32>,
    return
  }
  func.func @transform_0(%arg0: i32) -> (i32, i32) {
    %c0_i32 = arith.constant 0 : i32
    %c0_i32_0 = arith.constant 0 : i32
    return %c0_i32, %arg0 : i32, i32
  }
  func.func @transform_1(%arg0: i32) -> (i32, i32) {
    %c0_i32 = arith.constant 0 : i32
    %c0_i32_0 = arith.constant 0 : i32
    return %c0_i32, %arg0 : i32, i32
  }
  func.func @transform_2(%arg0: i32) -> (i32, i32) {
    %c0_i32 = arith.constant 0 : i32
    %c0_i32_0 = arith.constant 0 : i32
    return %c0_i32, %arg0 : i32, i32
  }
  func.func @transform_3(%arg0: i32) -> (i32, i32) {
    %c0_i32 = arith.constant 0 : i32
    %c0_i32_0 = arith.constant 0 : i32
    return %c0_i32, %arg0 : i32, i32
  }
  func.func @transform_4(%arg0: i32) -> (i32, i32) {
    %c0_i32 = arith.constant 0 : i32
    %c0_i32_0 = arith.constant 0 : i32
    return %c0_i32, %arg0 : i32, i32
  }
}

</mosaic_0001>

<llo_original>
// kernel: tpu_custom_call.1
$region0: #{tpu_custom_call.1}
  #allocation0 [shape = 'u32[]', space=smem, size = 0x4, offset = 0x4, fixed_abs, tag = 'smem constant byte address 0x4 - core index']
  #allocation1 [shape = 'u32[144,128]{1,0:T(1,128)}', space=vmem, size = 0x12000, scoped, tag = 'internal scratch']
  %s0 = inlined_call_operand.hbm [shape: f32[20,4096], index: 0, kind: input, shape index: {}]
  %s1 = inlined_call_operand.hbm [shape: s32[1,4096], index: 1, kind: input, shape index: {}]
  %s2 = inlined_call_operand.hbm [shape: f32[1,4096], index: 2, kind: output, shape index: {0}]
  %s3 = inlined_call_operand.hbm [shape: f32[1,4096], index: 3, kind: output, shape index: {1}]
  %s4 = inlined_call_operand.hbm [shape: f32[1,4096], index: 4, kind: output, shape index: {2}]
  %5 = xla_tuple %s2, %s3, %s4
  %s6 = sld [smem:[#allocation0]]
  $region65: #{tpu_custom_call.1} parent=0
    _
  %s8 = ssub.s32 1, %s6
  %s9 = scalar_select 0, %s8, %s6
  $region1: #{tpu_custom_call.1} parent=0
    #allocation2 [shape = 'u8[98304]{0}', space=vmem, size = 0x18000, scoped, tag = 'input window, operand 0']
    #allocation3 [shape = 's32[2]{0}', space=sflag, size = 0x8, scoped, tag = 'scoped memory for tpu_custom_call.1']
    #allocation4 [shape = 's32[2]{0}', space=sflag, size = 0x8, scoped, tag = 'scoped memory for tpu_custom_call.1']
    #allocation5 [shape = 'u8[4096]{0}', space=vmem, size = 0x1000, scoped, tag = 'input window, operand 1']
    #allocation6 [shape = 's32[2]{0}', space=sflag, size = 0x8, scoped, tag = 'scoped memory for tpu_custom_call.1']
    #allocation7 [shape = 'u8[4096]{0}', space=vmem, size = 0x1000, scoped, tag = 'output window, operand 0']
    #allocation8 [shape = 'u8[4096]{0}', space=vmem, size = 0x1000, scoped, tag = 'output window, operand 1']
    #allocation9 [shape = 's32[2]{0}', space=sflag, size = 0x8, scoped, tag = 'scoped memory for tpu_custom_call.1']
    #allocation10 [shape = 'u8[4096]{0}', space=vmem, size = 0x1000, scoped, tag = 'output window, operand 2']
    %10 = vsyncpa [#allocation3], 0
    %s11 = scalar_lea.sflag [#allocation3], 1
    %12 = vsyncpa %s11, 0
    %13 = vsyncpa [#allocation6], 0
    %s14 = scalar_lea.sflag [#allocation6], 1
    %15 = vsyncpa %s14, 0
    %16 = vsyncpa [#allocation4], 0
    %s17 = scalar_lea.sflag [#allocation4], 1
    %18 = vsyncpa %s17, 0
    %19 = vsyncpa [#allocation9], 0
    %s20 = scalar_lea.sflag [#allocation9], 1
    %21 = vsyncpa %s20, 0
    loop: start=0, step=1, limit=10
    $region2: #{tpu_custom_call.1} parent=1 // loop_pre_header
      _
    $region3: #{tpu_custom_call.1} parent=1 // loop_header
      %s23 = sphi 0, %s27
      %p24 = scmp.ge.s32.totalorder %s23, 10
      %s33 = sphi 0, %s35
      %s36 = sphi 0, %s33
      %s37 = sphi 0, %s36
      %s53 = sphi 0, %s37
      %s59 = sphi 0, %s61
      %s62 = sphi 0, %s59
      %s63 = sphi 0, %s62
      %s79 = sphi 0, %s63
      %s85 = sphi 0, %s87
      %s88 = sphi 0, %s85
      %s89 = sphi 0, %s88
      %s105 = sphi 0, %s89
      %s111 = sphi 0, %s113
      %s114 = sphi 0, %s111
      %s115 = sphi 0, %s114
      %s131 = sphi 0, %s115
      %s137 = sphi 0, %s139
      %s140 = sphi 0, %s137
      %s141 = sphi 0, %s140
      %s157 = sphi 0, %s141
    $region4: #{tpu_custom_call.1} parent=1 // loop_header_branch
      %26 = sbr.rel (%p24) target = $region8
    $region5: #{tpu_custom_call.1} parent=1 // loop_body
      %s28 = ssub.s32 %s23, 1
      %s29 = ssub.s32 %s23, 2
      %s30 = sadd.s32 %s23, 1
      %s31 = ssub.s32 %s23, %s30
      %p32 = scmp.eq.s32.totalorder %s31, 0
      %s34 = sadd.s32 %s33, 1
      %s35 = scalar_select %p32, %s33, %s34
      %p38 = pneg %p32
      %p39 = scmp.eq.s32.totalorder %s23, 7
      %p40 = por %p38, %p39
      %p41 = scmp.ne.s32.totalorder %s33, %s36
      %p42 = scmp.eq.s32.totalorder %s23, 0
      %p43 = por %p41, %p42
      %p44 = scmp.ne.s32.totalorder %s33, %s36
      %p45 = scmp.eq.s32.totalorder %s28, 7
      %p46 = por %p44, %p45
      %p47 = scmp.ne.s32.totalorder %s36, %s37
      %p48 = scmp.eq.s32.totalorder %s28, 0
      %p49 = por %p47, %p48
      %p50 = scmp.ne.s32.totalorder %s36, %s37
      %p51 = scmp.eq.s32.totalorder %s29, 7
      %p52 = por %p50, %p51
      %p54 = scmp.ne.s32.totalorder %s37, %s53
      %p55 = scmp.eq.s32.totalorder %s29, 0
      %p56 = por %p54, %p55
      %s57 = ssub.s32 %s23, %s30
      %p58 = scmp.eq.s32.totalorder %s57, 0
      %s60 = sadd.s32 %s59, 1
      %s61 = scalar_select %p58, %s59, %s60
      %p64 = pneg %p58
      %p65 = scmp.eq.s32.totalorder %s23, 7
      %p66 = por %p64, %p65
      %p67 = scmp.ne.s32.totalorder %s59, %s62
      %p68 = scmp.eq.s32.totalorder %s23, 0
      %p69 = por %p67, %p68
      %p70 = scmp.ne.s32.totalorder %s59, %s62
      %p71 = scmp.eq.s32.totalorder %s28, 7
      %p72 = por %p70, %p71
      %p73 = scmp.ne.s32.totalorder %s62, %s63
      %p74 = scmp.eq.s32.totalorder %s28, 0
      %p75 = por %p73, %p74
      %p76 = scmp.ne.s32.totalorder %s62, %s63
      %p77 = scmp.eq.s32.totalorder %s29, 7
      %p78 = por %p76, %p77
      %p80 = scmp.ne.s32.totalorder %s63, %s79
      %p81 = scmp.eq.s32.totalorder %s29, 0
      %p82 = por %p80, %p81
      %s83 = ssub.s32 %s23, %s30
      %p84 = scmp.eq.s32.totalorder %s83, 0
      %s86 = sadd.s32 %s85, 1
      %s87 = scalar_select %p84, %s85, %s86
      %p90 = pneg %p84
      %p91 = scmp.eq.s32.totalorder %s23, 7
      %p92 = por %p90, %p91
      %p93 = scmp.ne.s32.totalorder %s85, %s88
      %p94 = scmp.eq.s32.totalorder %s23, 0
      %p95 = por %p93, %p94
      %p96 = scmp.ne.s32.totalorder %s85, %s88
      %p97 = scmp.eq.s32.totalorder %s28, 7
      %p98 = por %p96, %p97
      %p99 = scmp.ne.s32.totalorder %s88, %s89
      %p100 = scmp.eq.s32.totalorder %s28, 0
      %p101 = por %p99, %p100
      %p102 = scmp.ne.s32.totalorder %s88, %s89
      %p103 = scmp.eq.s32.totalorder %s29, 7
      %p104 = por %p102, %p103
      %p106 = scmp.ne.s32.totalorder %s89, %s105
      %p107 = scmp.eq.s32.totalorder %s29, 0
      %p108 = por %p106, %p107
      %s109 = ssub.s32 %s23, %s30
      %p110 = scmp.eq.s32.totalorder %s109, 0
      %s112 = sadd.s32 %s111, 1
      %s113 = scalar_select %p110, %s111, %s112
      %p116 = pneg %p110
      %p117 = scmp.eq.s32.totalorder %s23, 7
      %p118 = por %p116, %p117
      %p119 = scmp.ne.s32.totalorder %s111, %s114
      %p120 = scmp.eq.s32.totalorder %s23, 0
      %p121 = por %p119, %p120
      %p122 = scmp.ne.s32.totalorder %s111, %s114
      %p123 = scmp.eq.s32.totalorder %s28, 7
      %p124 = por %p122, %p123
      %p125 = scmp.ne.s32.totalorder %s114, %s115
      %p126 = scmp.eq.s32.totalorder %s28, 0
      %p127 = por %p125, %p126
      %p128 = scmp.ne.s32.totalorder %s114, %s115
      %p129 = scmp.eq.s32.totalorder %s29, 7
      %p130 = por %p128, %p129
      %p132 = scmp.ne.s32.totalorder %s115, %s131
      %p133 = scmp.eq.s32.totalorder %s29, 0
      %p134 = por %p132, %p133
      %s135 = ssub.s32 %s23, %s30
      %p136 = scmp.eq.s32.totalorder %s135, 0
      %s138 = sadd.s32 %s137, 1
      %s139 = scalar_select %p136, %s137, %s138
      %p142 = pneg %p136
      %p143 = scmp.eq.s32.totalorder %s23, 7
      %p144 = por %p142, %p143
      %p145 = scmp.ne.s32.totalorder %s137, %s140
      %p146 = scmp.eq.s32.totalorder %s23, 0
      %p147 = por %p145, %p146
      %p148 = scmp.ne.s32.totalorder %s137, %s140
      %p149 = scmp.eq.s32.totalorder %s28, 7
      %p150 = por %p148, %p149
      %p151 = scmp.ne.s32.totalorder %s140, %s141
      %p152 = scmp.eq.s32.totalorder %s28, 0
      %p153 = por %p151, %p152
      %p154 = scmp.ne.s32.totalorder %s140, %s141
      %p155 = scmp.eq.s32.totalorder %s29, 7
      %p156 = por %p154, %p155
      %p158 = scmp.ne.s32.totalorder %s141, %s157
      %p159 = scmp.eq.s32.totalorder %s29, 0
      %p160 = por %p158, %p159
      %p161 = scmp.le.s32.totalorder 1, %s23
      %p162 = scmp.lt.s32.totalorder %s23, 9
      %p163 = pnand %p161, %p162
      %p164 = pneg %p163
      // Predicated region
      $region9: #{tpu_custom_call.1} parent=5 // pred_check
        _
      $region10: #{tpu_custom_call.1} parent=5 // pred_check_branch
        %166 = sbr.rel (%p163) target = $region12
      $region11: #{tpu_custom_call.1} parent=5 // pred_region
        %s167 = ssub.s32 %s23, 1
      $region12: #{tpu_custom_call.1} parent=5 // pred_fallthru
        _
      %p168 = scmp.lt.s32.totalorder %s23, 8
      // Predicated region
      $region13: #{tpu_custom_call.1} parent=5 // pred_check
        %p169 = pneg %p168
      $region14: #{tpu_custom_call.1} parent=5 // pred_check_branch
        %171 = sbr.rel (%p169) target = $region16
      $region15: #{tpu_custom_call.1} parent=5 // pred_region
        // Predicated region
        $region17: #{tpu_custom_call.1} parent=15 // pred_check
          %p172 = pneg %p43
        $region18: #{tpu_custom_call.1} parent=15 // pred_check_branch
          %174 = sbr.rel (%p172) target = $region20
        $region19: #{tpu_custom_call.1} parent=15 // pred_region
          %s175 = sand.u32 %s33, 1
          %s176 = scalar_lea.sflag [#allocation3], %s175
          %s177 = sand.u32 %s33, 1
          %s178 = smul.addr %s177, 96
          %s179 = scalar_lea.vmem [#allocation2], %s178
          %s180 = smul.u32 4, %s23
          %s182 = ssub.s32 1536, 1536
          %183 = vsyncadd %s176, %s182
          %s184 = smul.addr %s180, 128
          %s185 = scalar_lea.hbm %s0, %s184
          %s186 = sshll.u32 %s179, 4
          %s187 = int_to_ptr.vmem [resolvable:$true] %s186
          %192 = dma.hbm_to_vmem [thread:$0]  %s185, 1536, %s187, %s176, 4096, 512, 32
        $region20: #{tpu_custom_call.1} parent=15 // pred_fallthru
          _
        // Predicated region
        $region21: #{tpu_custom_call.1} parent=15 // pred_check
          %p193 = pneg %p69
        $region22: #{tpu_custom_call.1} parent=15 // pred_check_branch
          %195 = sbr.rel (%p193) target = $region24
        $region23: #{tpu_custom_call.1} parent=15 // pred_region
          %s196 = sand.u32 %s59, 1
          %s197 = scalar_lea.sflag [#allocation6], %s196
          %s198 = sand.u32 %s59, 1
          %s199 = smul.addr %s198, 4
          %s200 = scalar_lea.vmem [#allocation5], %s199
          %s201 = smul.u32 4, %s23
          %s203 = ssub.s32 64, 64
          %204 = vsyncadd %s197, %s203
          %s205 = smul.addr %s201, 16
          %s206 = scalar_lea.hbm %s1, %s205
          %s208 = sshll.u32 %s200, 4
          %s209 = int_to_ptr.vmem [resolvable:$true] %s208
          %211 = dma.hbm_to_vmem [thread:$0]  %s206, 64, %s209, %s197
        $region24: #{tpu_custom_call.1} parent=15 // pred_fallthru
          _
      $region16: #{tpu_custom_call.1} parent=5 // pred_fallthru
        _
      %p212 = scmp.le.s32.totalorder 1, %s23
      %p213 = scmp.lt.s32.totalorder %s23, 9
      %p214 = pnand %p212, %p213
      %p215 = pneg %p214
      // Predicated region
      $region25: #{tpu_custom_call.1} parent=5 // pred_check
        _
      $region26: #{tpu_custom_call.1} parent=5 // pred_check_branch
        %217 = sbr.rel (%p214) target = $region28
      $region27: #{tpu_custom_call.1} parent=5 // pred_region
        %s218 = ssub.s32 %s23, 1
        %s219 = sand.u32 %s36, 1
        %s220 = scalar_lea.sflag [#allocation3], %s219
        %s221 = sand.u32 %s36, 1
        %s222 = smul.addr %s221, 96
        %s223 = scalar_lea.vmem [#allocation2], %s222
        // Predicated region
        $region29: #{tpu_custom_call.1} parent=27 // pred_check
          %p224 = pneg %p49
        $region30: #{tpu_custom_call.1} parent=27 // pred_check_branch
          %226 = sbr.rel (%p224) target = $region32
        $region31: #{tpu_custom_call.1} parent=27 // pred_region
          %227 = dma.done %s220, 1536
        $region32: #{tpu_custom_call.1} parent=27 // pred_fallthru
          _
        %s228 = sand.u32 %s62, 1
        %s229 = scalar_lea.sflag [#allocation6], %s228
        %s230 = sand.u32 %s62, 1
        %s231 = smul.addr %s230, 4
        %s232 = scalar_lea.vmem [#allocation5], %s231
        // Predicated region
        $region33: #{tpu_custom_call.1} parent=27 // pred_check
          %p233 = pneg %p75
        $region34: #{tpu_custom_call.1} parent=27 // pred_check_branch
          %235 = sbr.rel (%p233) target = $region36
        $region35: #{tpu_custom_call.1} parent=27 // pred_region
          %236 = dma.done %s229, 64
        $region36: #{tpu_custom_call.1} parent=27 // pred_fallthru
          _
        %s237 = sand.u32 %s36, 1
        %s238 = scalar_lea.sflag [#allocation3], %s237
        %s239 = sand.u32 %s36, 1
        %s240 = smul.addr %s239, 96
        %s241 = scalar_lea.vmem [#allocation2], %s240
        %p242 = pneg %p49
        %p243 = pneg %p46
        %s244 = sand.u32 %s62, 1
        %s245 = scalar_lea.sflag [#allocation6], %s244
        %s246 = sand.u32 %s62, 1
        %s247 = smul.addr %s246, 4
        %s248 = scalar_lea.vmem [#allocation5], %s247
        %p249 = pneg %p75
        %p250 = pneg %p72
        %p251 = pneg %p101
        %p252 = pneg %p98
        %s253 = sand.u32 %s88, 1
        %s254 = scalar_lea.sflag [#allocation4], %s253
        %s255 = sand.u32 %s88, 1
        %s256 = smul.addr %s255, 4
        %s257 = scalar_lea.vmem [#allocation7], %s256
        %p258 = pneg %p127
        %p259 = pneg %p124
        %s260 = sand.u32 %s28, 1
        %s261 = scalar_lea.sflag [#allocation9], %s260
        %s262 = sand.u32 %s114, 1
        %s263 = smul.addr %s262, 4
        %s264 = scalar_lea.vmem [#allocation8], %s263
        %p265 = pneg %p153
        %p266 = pneg %p150
        %s267 = sand.u32 %s28, 1
        %s268 = scalar_lea.sflag [#allocation9], %s267
        %s269 = sand.u32 %s140, 1
        %s270 = smul.addr %s269, 4
        %s271 = scalar_lea.vmem [#allocation10], %s270
        %s272 = smul.u32 4, %s28
        %s273 = smul.u32 4, %s28
        %s274 = smul.u32 4, %s28
        %s275 = smul.u32 4, %s28
        %s276 = smul.u32 4, %s28
        %v277 = vld [vmem:[%s223] sm:$0xff]
        %v278 = vld [vmem:[%s223 + $0x8] sm:$0xff]
        %v279 = vld [vmem:[%s223 + $0x10] sm:$0xff]
        %v280 = vld [vmem:[%s223 + $0x18] sm:$0xff]
        %v281 = vld [vmem:[%s223 + $0x20] sm:$0xff]
        %v282 = vld [vmem:[%s223 + $0x28] sm:$0xff]
        %v283 = vld [vmem:[%s223 + $0x30] sm:$0xff]
        %v284 = vld [vmem:[%s223 + $0x38] sm:$0xff]
        %v285 = vld [vmem:[%s223 + $0x40] sm:$0xf]
        %v286 = vld [vmem:[%s223 + $0x48] sm:$0xf]
        %v287 = vld [vmem:[%s223 + $0x50] sm:$0xf]
        %v288 = vld [vmem:[%s223 + $0x58] sm:$0xf]
        %v289 = vmax.f32 %v277, %v281
        %vm290 = vcmask 1043456
        %v291 = vsel %vm290, %v285, -inf
        %v292 = vmax.f32 %v289, %v291
        %v293 = vrot.slane %v292, 4
        %v294 = vmax.f32 %v292, %v293
        %v295 = vrot.slane %v294, 2
        %v296 = vmax.f32 %v294, %v295
        %v297 = vrot.slane %v296, 1
        %v298 = vmax.f32 %v296, %v297
        %v299 = vmax.f32 %v278, %v282
        %v300 = vsel %vm290, %v286, -inf
        %v301 = vmax.f32 %v299, %v300
        %v302 = vrot.slane %v301, 4
        %v303 = vmax.f32 %v301, %v302
        %v304 = vrot.slane %v303, 2
        %v305 = vmax.f32 %v303, %v304
        %v306 = vrot.slane %v305, 1
        %v307 = vmax.f32 %v305, %v306
        %v308 = vmax.f32 %v279, %v283
        %v309 = vsel %vm290, %v287, -inf
        %v310 = vmax.f32 %v308, %v309
        %v311 = vrot.slane %v310, 4
        %v312 = vmax.f32 %v310, %v311
        %v313 = vrot.slane %v312, 2
        %v314 = vmax.f32 %v312, %v313
        %v315 = vrot.slane %v314, 1
        %v316 = vmax.f32 %v314, %v315
        %v317 = vmax.f32 %v280, %v284
        %v318 = vsel %vm290, %v288, -inf
        %v319 = vmax.f32 %v317, %v318
        %v320 = vrot.slane %v319, 4
        %v321 = vmax.f32 %v319, %v320
        %v322 = vrot.slane %v321, 2
        %v323 = vmax.f32 %v321, %v322
        %v324 = vrot.slane %v323, 1
        %v325 = vmax.f32 %v323, %v324
        %v326 = vsub.f32 %v277, %v298
        %v327 = vsub.f32 %v278, %v307
        %v328 = vsub.f32 %v279, %v316
        %v329 = vsub.f32 %v280, %v325
        %v330 = vsub.f32 %v281, %v298
        %v331 = vsub.f32 %v282, %v307
        %v332 = vsub.f32 %v283, %v316
        %v333 = vsub.f32 %v284, %v325
        %v334 = vsub.f32 %v285, %v298
        %v335 = vsub.f32 %v286, %v307
        %v336 = vsub.f32 %v287, %v316
        %v337 = vsub.f32 %v288, %v325
        %v338 = vmul.f32 %v326, 1.442695
        %v339 = vpow.pop %v338
        %v340 = vmul.f32 %v327, 1.442695
        %v341 = vpow.pop %v340
        %v342 = vmul.f32 %v328, 1.442695
        %v343 = vpow.pop %v342
        %v344 = vmul.f32 %v329, 1.442695
        %v345 = vpow.pop %v344
        %v346 = vmul.f32 %v330, 1.442695
        %v347 = vpow.pop %v346
        %v348 = vmul.f32 %v331, 1.442695
        %v349 = vpow.pop %v348
        %v350 = vmul.f32 %v332, 1.442695
        %v351 = vpow.pop %v350
        %v352 = vmul.f32 %v333, 1.442695
        %v353 = vpow.pop %v352
        %v354 = vmul.f32 %v334, 1.442695
        %v355 = vpow.pop %v354
        %v356 = vmul.f32 %v335, 1.442695
        %v357 = vpow.pop %v356
        %v358 = vmul.f32 %v336, 1.442695
        %v359 = vpow.pop %v358
        %v360 = vmul.f32 %v337, 1.442695
        %v361 = vpow.pop %v360
        %v362 = vadd.f32 %v339, %v347
        %v363 = vsel %vm290, %v355, 0.0
        %v364 = vadd.f32 %v362, %v363
        %v365 = vrot.slane %v364, 4
        %v366 = vadd.f32 %v364, %v365
        %v367 = vrot.slane %v366, 2
        %v368 = vadd.f32 %v366, %v367
        %v369 = vrot.slane %v368, 1
        %v370 = vadd.f32 %v368, %v369
        %v371 = vadd.f32 %v341, %v349
        %v372 = vsel %vm290, %v357, 0.0
        %v373 = vadd.f32 %v371, %v372
        %v374 = vrot.slane %v373, 4
        %v375 = vadd.f32 %v373, %v374
        %v376 = vrot.slane %v375, 2
        %v377 = vadd.f32 %v375, %v376
        %v378 = vrot.slane %v377, 1
        %v379 = vadd.f32 %v377, %v378
        %v380 = vadd.f32 %v343, %v351
        %v381 = vsel %vm290, %v359, 0.0
        %v382 = vadd.f32 %v380, %v381
        %v383 = vrot.slane %v382, 4
        %v384 = vadd.f32 %v382, %v383
        %v385 = vrot.slane %v384, 2
        %v386 = vadd.f32 %v384, %v385
        %v387 = vrot.slane %v386, 1
        %v388 = vadd.f32 %v386, %v387
        %v389 = vadd.f32 %v345, %v353
        %v390 = vsel %vm290, %v361, 0.0
        %v391 = vadd.f32 %v389, %v390
        %v392 = vrot.slane %v391, 4
        %v393 = vadd.f32 %v391, %v392
        %v394 = vrot.slane %v393, 2
        %v395 = vadd.f32 %v393, %v394
        %v396 = vrot.slane %v395, 1
        %v397 = vadd.f32 %v395, %v396
        %v398 = vrcp.pop %v370
        %v399 = vrcp.pop %v379
        %v400 = vrcp.pop %v388
        %v401 = vrcp.pop %v397
        %v402 = vmul.f32 %v370, %v398
        %v403 = vmul.f32 %v379, %v399
        %v404 = vmul.f32 %v388, %v400
        %v405 = vmul.f32 %v397, %v401
        %v406 = vsub.f32 2.0, %v402
        %v407 = vsub.f32 2.0, %v403
        %v408 = vsub.f32 2.0, %v404
        %v409 = vsub.f32 2.0, %v405
        %v410 = vmul.f32 %v398, %v406
        %v411 = vmul.f32 %v399, %v407
        %v412 = vmul.f32 %v400, %v408
        %v413 = vmul.f32 %v401, %v409
        %v414 = vmul.f32 %v339, %v410
        %v415 = vmul.f32 %v341, %v411
        %v416 = vmul.f32 %v343, %v412
        %v417 = vmul.f32 %v345, %v413
        %v418 = vmul.f32 %v347, %v410
        %v419 = vmul.f32 %v349, %v411
        %v420 = vmul.f32 %v351, %v412
        %v421 = vmul.f32 %v353, %v413
        %v422 = vmul.f32 %v355, %v410
        %v423 = vmul.f32 %v357, %v411
        %v424 = vmul.f32 %v359, %v412
        %v425 = vmul.f32 %v361, %v413
        %v426 = vmax.f32 %v414, 1e-07
        %v427 = vmax.f32 %v415, 1e-07
        %v428 = vmax.f32 %v416, 1e-07
        %v429 = vmax.f32 %v417, 1e-07
        %v430 = vmax.f32 %v418, 1e-07
        %v431 = vmax.f32 %v419, 1e-07
        %v432 = vmax.f32 %v420, 1e-07
        %v433 = vmax.f32 %v421, 1e-07
        %v434 = vmax.f32 %v422, 1e-07
        %v435 = vmax.f32 %v423, 1e-07
        %v436 = vmax.f32 %v424, 1e-07
        %v437 = vmax.f32 %v425, 1e-07
        %v438 = vmul.f32 %v426, 0.069481514
        %v439 = vmul.f32 %v427, 0.069481514
        %v440 = vmul.f32 %v428, 0.069481514
        %v441 = vmul.f32 %v429, 0.069481514
        %v442 = vmul.f32 %v430, 0.069481514
        %v443 = vmul.f32 %v431, 0.069481514
        %v444 = vmul.f32 %v432, 0.069481514
        %v445 = vmul.f32 %v433, 0.069481514
        %v446 = vmul.f32 %v434, 0.069481514
        %v447 = vmul.f32 %v435, 0.069481514
        %v448 = vmul.f32 %v436, 0.069481514
        %v449 = vmul.f32 %v437, 0.069481514
        %v450 = vadd.f32 %v438, 0.13966398
        %v451 = vadd.f32 %v439, 0.13966398
        %v452 = vadd.f32 %v440, 0.13966398
        %v453 = vadd.f32 %v441, 0.13966398
        %v454 = vadd.f32 %v442, 0.13966398
        %v455 = vadd.f32 %v443, 0.13966398
        %v456 = vadd.f32 %v444, 0.13966398
        %v457 = vadd.f32 %v445, 0.13966398
        %v458 = vadd.f32 %v446, 0.13966398
        %v459 = vadd.f32 %v447, 0.13966398
        %v460 = vadd.f32 %v448, 0.13966398
        %v461 = vadd.f32 %v449, 0.13966398
        %v462 = vmul.f32 %v450, %v426
        %v463 = vmul.f32 %v451, %v427
        %v464 = vmul.f32 %v452, %v428
        %v465 = vmul.f32 %v453, %v429
        %v466 = vmul.f32 %v454, %v430
        %v467 = vmul.f32 %v455, %v431
        %v468 = vmul.f32 %v456, %v432
        %v469 = vmul.f32 %v457, %v433
        %v470 = vmul.f32 %v458, %v434
        %v471 = vmul.f32 %v459, %v435
        %v472 = vmul.f32 %v460, %v436
        %v473 = vmul.f32 %v461, %v437
        %v474 = vadd.f32 %v462, 0.51057684
        %v475 = vadd.f32 %v463, 0.51057684
        %v476 = vadd.f32 %v464, 0.51057684
        %v477 = vadd.f32 %v465, 0.51057684
        %v478 = vadd.f32 %v466, 0.51057684
        %v479 = vadd.f32 %v467, 0.51057684
        %v480 = vadd.f32 %v468, 0.51057684
        %v481 = vadd.f32 %v469, 0.51057684
        %v482 = vadd.f32 %v470, 0.51057684
        %v483 = vadd.f32 %v471, 0.51057684
        %v484 = vadd.f32 %v472, 0.51057684
        %v485 = vadd.f32 %v473, 0.51057684
        %v486 = vmul.f32 %v474, %v426
        %v487 = vmul.f32 %v475, %v427
        %v488 = vmul.f32 %v476, %v428
        %v489 = vmul.f32 %v477, %v429
        %v490 = vmul.f32 %v478, %v430
        %v491 = vmul.f32 %v479, %v431
        %v492 = vmul.f32 %v480, %v432
        %v493 = vmul.f32 %v481, %v433
        %v494 = vmul.f32 %v482, %v434
        %v495 = vmul.f32 %v483, %v435
        %v496 = vmul.f32 %v484, %v436
        %v497 = vmul.f32 %v485, %v437
        %v498 = vadd.f32 %v486, 0.99844944
        %v499 = vadd.f32 %v487, 0.99844944
        %v500 = vadd.f32 %v488, 0.99844944
        %v501 = vadd.f32 %v489, 0.99844944
        %v502 = vadd.f32 %v490, 0.99844944
        %v503 = vadd.f32 %v491, 0.99844944
        %v504 = vadd.f32 %v492, 0.99844944
        %v505 = vadd.f32 %v493, 0.99844944
        %v506 = vadd.f32 %v494, 0.99844944
        %v507 = vadd.f32 %v495, 0.99844944
        %v508 = vadd.f32 %v496, 0.99844944
        %v509 = vadd.f32 %v497, 0.99844944
        %v510 = vmul.f32 %v498, %v426
        %v511 = vmul.f32 %v499, %v427
        %v512 = vmul.f32 %v500, %v428
        %v513 = vmul.f32 %v501, %v429
        %v514 = vmul.f32 %v502, %v430
        %v515 = vmul.f32 %v503, %v431
        %v516 = vmul.f32 %v504, %v432
        %v517 = vmul.f32 %v505, %v433
        %v518 = vmul.f32 %v506, %v434
        %v519 = vmul.f32 %v507, %v435
        %v520 = vmul.f32 %v508, %v436
        %v521 = vmul.f32 %v509, %v437
        %v522 = vadd.f32 %v510, 1.0000526
        %v523 = vadd.f32 %v511, 1.0000526
        %v524 = vadd.f32 %v512, 1.0000526
        %v525 = vadd.f32 %v513, 1.0000526
        %v526 = vadd.f32 %v514, 1.0000526
        %v527 = vadd.f32 %v515, 1.0000526
        %v528 = vadd.f32 %v516, 1.0000526
        %v529 = vadd.f32 %v517, 1.0000526
        %v530 = vadd.f32 %v518, 1.0000526
        %v531 = vadd.f32 %v519, 1.0000526
        %v532 = vadd.f32 %v520, 1.0000526
        %v533 = vadd.f32 %v521, 1.0000526
        %vm534 = vcmask 1044480
        %v535 = vsel %vm534, %v522, 0.0
        %v536 = vrot.slane %v535, 4
        %v537 = vadd.f32 %v535, %v536
        %v538 = vrot.slane %v537, 2
        %v539 = vadd.f32 %v537, %v538
        %v540 = vrot.slane %v539, 1
        %v541 = vadd.f32 %v539, %v540
        %v542 = vsel %vm534, %v523, 0.0
        %v543 = vrot.slane %v542, 4
        %v544 = vadd.f32 %v542, %v543
        %v545 = vrot.slane %v544, 2
        %v546 = vadd.f32 %v544, %v545
        %v547 = vrot.slane %v546, 1
        %v548 = vadd.f32 %v546, %v547
        %v549 = vsel %vm534, %v524, 0.0
        %v550 = vrot.slane %v549, 4
        %v551 = vadd.f32 %v549, %v550
        %v552 = vrot.slane %v551, 2
        %v553 = vadd.f32 %v551, %v552
        %v554 = vrot.slane %v553, 1
        %v555 = vadd.f32 %v553, %v554
        %v556 = vsel %vm534, %v525, 0.0
        %v557 = vrot.slane %v556, 4
        %v558 = vadd.f32 %v556, %v557
        %v559 = vrot.slane %v558, 2
        %v560 = vadd.f32 %v558, %v559
        %v561 = vrot.slane %v560, 1
        %v562 = vadd.f32 %v560, %v561
        %vm575 = vcmask 1041408
        %v576 = vrot.slane %v522, 6
        %v577 = vrot.slane %v526, 6
        %v578 = vsel %vm575, %v576, %v577
        %v579 = vrot.slane %v523, 6
        %v580 = vrot.slane %v527, 6
        %v581 = vsel %vm575, %v579, %v580
        %v582 = vrot.slane %v524, 6
        %v583 = vrot.slane %v528, 6
        %v584 = vsel %vm575, %v582, %v583
        %v585 = vrot.slane %v525, 6
        %v586 = vrot.slane %v529, 6
        %v587 = vsel %vm575, %v585, %v586
        %v588 = vrot.slane %v530, 6
        %v589 = vsel %vm575, %v577, %v588
        %v590 = vrot.slane %v531, 6
        %v591 = vsel %vm575, %v580, %v590
        %v592 = vrot.slane %v532, 6
        %v593 = vsel %vm575, %v583, %v592
        %v594 = vrot.slane %v533, 6
        %v595 = vsel %vm575, %v586, %v594
        %vm604 = vcmask 1045504
        %v605 = vsel %vm604, %v589, 0.0
        %v606 = vadd.f32 %v578, %v605
        %v607 = vrot.slane %v606, 4
        %v608 = vadd.f32 %v606, %v607
        %v609 = vrot.slane %v608, 2
        %v610 = vadd.f32 %v608, %v609
        %v611 = vrot.slane %v610, 1
        %v612 = vadd.f32 %v610, %v611
        %v613 = vsel %vm604, %v591, 0.0
        %v614 = vadd.f32 %v581, %v613
        %v615 = vrot.slane %v614, 4
        %v616 = vadd.f32 %v614, %v615
        %v617 = vrot.slane %v616, 2
        %v618 = vadd.f32 %v616, %v617
        %v619 = vrot.slane %v618, 1
        %v620 = vadd.f32 %v618, %v619
        %v621 = vsel %vm604, %v593, 0.0
        %v622 = vadd.f32 %v584, %v621
        %v623 = vrot.slane %v622, 4
        %v624 = vadd.f32 %v622, %v623
        %v625 = vrot.slane %v624, 2
        %v626 = vadd.f32 %v624, %v625
        %v627 = vrot.slane %v626, 1
        %v628 = vadd.f32 %v626, %v627
        %v629 = vsel %vm604, %v595, 0.0
        %v630 = vadd.f32 %v587, %v629
        %v631 = vrot.slane %v630, 4
        %v632 = vadd.f32 %v630, %v631
        %v633 = vrot.slane %v632, 2
        %v634 = vadd.f32 %v632, %v633
        %v635 = vrot.slane %v634, 1
        %v636 = vadd.f32 %v634, %v635
        %v637 = vadd.f32 %v541, %v612
        %v638 = vadd.f32 %v548, %v620
        %v639 = vadd.f32 %v555, %v628
        %v640 = vadd.f32 %v562, %v636
        %v641 = vlog2.pop %v637
        %v642 = vmul.f32 %v641, 0.6931472
        %v643 = vlog2.pop %v638
        %v644 = vmul.f32 %v643, 0.6931472
        %v645 = vlog2.pop %v639
        %v646 = vmul.f32 %v645, 0.6931472
        %v647 = vlog2.pop %v640
        %v648 = vmul.f32 %v647, 0.6931472
        %v649 = vmul.f32 %v642, %v642
        %v650 = vmul.f32 %v644, %v644
        %v651 = vmul.f32 %v646, %v646
        %v652 = vmul.f32 %v648, %v648
        %v657 = vcombine.low %v649, %v650
        %v658 = vcombine.low %v651, %v652
        %v660 = vunpack.c.l.s4 1966171168
        %v661 = vunpack.c.0.s8 %v660
        %v662 = vlaneseq
        %v663 = vshrl.u32 %v662, 7
        %v664 = vsub.s32 %v661, %v663
        %v665 = vrot.slane %v657, %v664
        %v667 = vunpack.c.l.s4 1966171168
        %v668 = vunpack.c.0.s8 %v667
        %v669 = vlaneseq
        %v670 = vshrl.u32 %v669, 7
        %v671 = vsub.s32 %v668, %v670
        %v672 = vrot.slane %v658, %v671
        %v673 = vcombine.low %v665, %v672
        %v675 = vunpack.c.l.s4 1966171168
        %v676 = vunpack.c.0.s8 %v675
        %v677 = vlaneseq
        %v678 = vshrl.u32 %v677, 7
        %v679 = vsub.s32 %v676, %v678
        %v680 = vrot.slane %v673, %v679
        %v682 = vlaneseq
        %vm683 = vcmp.ge.s32.totalorder %v682, 0
        %vm684 = vcmp.lt.s32.totalorder %v682, 512
        %vm685 = vmand %vm683, %vm684
        %686 = vst.msk [vmem:[%s257] sm:$0xf] %vm685, %v680
        %v691 = vcombine.high %v426, %v427
        %v692 = vcombine.high %v428, %v429
        %v694 = vunpack.c.l.s4 1966171168
        %v695 = vunpack.c.0.s8 %v694
        %v696 = vlaneseq
        %v697 = vshrl.u32 %v696, 7
        %v698 = vsub.s32 %v695, %v697
        %v699 = vrot.slane %v691, %v698
        %v701 = vunpack.c.l.s4 1966171168
        %v702 = vunpack.c.0.s8 %v701
        %v703 = vlaneseq
        %v704 = vshrl.u32 %v703, 7
        %v705 = vsub.s32 %v702, %v704
        %v706 = vrot.slane %v692, %v705
        %v707 = vcombine.high %v699, %v706
        %v709 = vunpack.c.l.s4 1966171168
        %v710 = vunpack.c.0.s8 %v709
        %v711 = vlaneseq
        %v712 = vshrl.u32 %v711, 7
        %v713 = vsub.s32 %v710, %v712
        %v714 = vrot.slane %v707, %v713
        %716 = vst.msk [vmem:[%s264] sm:$0xf] %vm685, %v714
        %v717 = vld [vmem:[%s232] sm:$0xf]
        %vm718 = vcmp.gt.s32.totalorder %v717, 5
        %v719 = vsel %vm718, 1, 0
        %v720 = vsub.s32 %v717, %v719
        %vm721 = vcmp.ge.s32.totalorder %v720, 5
        %v722 = vsel %vm721, 1, 0
        %v723 = vadd.s32 %v720, %v722
        %v724 = vlaneseq
        %v725 = vshrl.u32 %v724, 7
        %v726 = vadd.s32 %v725, 8
        %v727 = vadd.s32 %v725, 16
        %v728 = vlaneseq
        %v729 = vshrl.u32 %v728, 7
        %v730 = vsub.s32 0, %v729
        %v731 = vrot.slane %v723, %v730
        %v732 = vlaneseq
        %v733 = vshrl.u32 %v732, 7
        %v734 = vsub.s32 1, %v733
        %v735 = vrot.slane %v723, %v734
        %v736 = vlaneseq
        %v737 = vshrl.u32 %v736, 7
        %v738 = vsub.s32 2, %v737
        %v739 = vrot.slane %v723, %v738
        %v740 = vlaneseq
        %v741 = vshrl.u32 %v740, 7
        %v742 = vsub.s32 3, %v741
        %v743 = vrot.slane %v723, %v742
        %vm744 = vcmp.eq.s32.totalorder %v725, %v731
        %vm745 = vcmp.eq.s32.totalorder %v725, %v735
        %vm746 = vcmp.eq.s32.totalorder %v725, %v739
        %vm747 = vcmp.eq.s32.totalorder %v725, %v743
        %vm748 = vcmp.eq.s32.totalorder %v726, %v731
        %vm749 = vcmp.eq.s32.totalorder %v726, %v735
        %vm750 = vcmp.eq.s32.totalorder %v726, %v739
        %vm751 = vcmp.eq.s32.totalorder %v726, %v743
        %vm752 = vcmp.eq.s32.totalorder %v727, %v731
        %vm753 = vcmp.eq.s32.totalorder %v727, %v735
        %vm754 = vcmp.eq.s32.totalorder %v727, %v739
        %vm755 = vcmp.eq.s32.totalorder %v727, %v743
        %v756 = vsel %vm744, %v426, 0.0
        %v757 = vsel %vm745, %v427, 0.0
        %v758 = vsel %vm746, %v428, 0.0
        %v759 = vsel %vm747, %v429, 0.0
        %v760 = vsel %vm748, %v430, 0.0
        %v761 = vsel %vm749, %v431, 0.0
        %v762 = vsel %vm750, %v432, 0.0
        %v763 = vsel %vm751, %v433, 0.0
        %v764 = vsel %vm752, %v434, 0.0
        %v765 = vsel %vm753, %v435, 0.0
        %v766 = vsel %vm754, %v436, 0.0
        %v767 = vsel %vm755, %v437, 0.0
        %v768 = vadd.f32 %v756, %v760
        %v769 = vsel %vm290, %v764, 0.0
        %v770 = vadd.f32 %v768, %v769
        %v771 = vrot.slane %v770, 4
        %v772 = vadd.f32 %v770, %v771
        %v773 = vrot.slane %v772, 2
        %v774 = vadd.f32 %v772, %v773
        %v775 = vrot.slane %v774, 1
        %v776 = vadd.f32 %v774, %v775
        %v777 = vadd.f32 %v757, %v761
        %v778 = vsel %vm290, %v765, 0.0
        %v779 = vadd.f32 %v777, %v778
        %v780 = vrot.slane %v779, 4
        %v781 = vadd.f32 %v779, %v780
        %v782 = vrot.slane %v781, 2
        %v783 = vadd.f32 %v781, %v782
        %v784 = vrot.slane %v783, 1
        %v785 = vadd.f32 %v783, %v784
        %v786 = vadd.f32 %v758, %v762
        %v787 = vsel %vm290, %v766, 0.0
        %v788 = vadd.f32 %v786, %v787
        %v789 = vrot.slane %v788, 4
        %v790 = vadd.f32 %v788, %v789
        %v791 = vrot.slane %v790, 2
        %v792 = vadd.f32 %v790, %v791
        %v793 = vrot.slane %v792, 1
        %v794 = vadd.f32 %v792, %v793
        %v795 = vadd.f32 %v759, %v763
        %v796 = vsel %vm290, %v767, 0.0
        %v797 = vadd.f32 %v795, %v796
        %v798 = vrot.slane %v797, 4
        %v799 = vadd.f32 %v797, %v798
        %v800 = vrot.slane %v799, 2
        %v801 = vadd.f32 %v799, %v800
        %v802 = vrot.slane %v801, 1
        %v803 = vadd.f32 %v801, %v802
        %v808 = vcombine.low %v776, %v785
        %v809 = vcombine.low %v794, %v803
        %v811 = vunpack.c.l.s4 1966171168
        %v812 = vunpack.c.0.s8 %v811
        %v813 = vlaneseq
        %v814 = vshrl.u32 %v813, 7
        %v815 = vsub.s32 %v812, %v814
        %v816 = vrot.slane %v808, %v815
        %v818 = vunpack.c.l.s4 1966171168
        %v819 = vunpack.c.0.s8 %v818
        %v820 = vlaneseq
        %v821 = vshrl.u32 %v820, 7
        %v822 = vsub.s32 %v819, %v821
        %v823 = vrot.slane %v809, %v822
        %v824 = vcombine.low %v816, %v823
        %v826 = vunpack.c.l.s4 1966171168
        %v827 = vunpack.c.0.s8 %v826
        %v828 = vlaneseq
        %v829 = vshrl.u32 %v828, 7
        %v830 = vsub.s32 %v827, %v829
        %v831 = vrot.slane %v824, %v830
        %833 = vst.msk [vmem:[%s271] sm:$0xf] %vm685, %v831
        %s834 = sand.u32 %s88, 1
        %s835 = scalar_lea.sflag [#allocation4], %s834
        %s836 = sand.u32 %s88, 1
        %s837 = smul.addr %s836, 4
        %s838 = scalar_lea.vmem [#allocation7], %s837
        %s839 = sand.u32 %s28, 1
        %s840 = scalar_lea.sflag [#allocation9], %s839
        %s841 = sand.u32 %s114, 1
        %s842 = smul.addr %s841, 4
        %s843 = scalar_lea.vmem [#allocation8], %s842
        %s844 = sand.u32 %s28, 1
        %s845 = scalar_lea.sflag [#allocation9], %s844
        %s846 = sand.u32 %s140, 1
        %s847 = smul.addr %s846, 4
        %s848 = scalar_lea.vmem [#allocation10], %s847
        // Predicated region
        $region37: #{tpu_custom_call.1} parent=27 // pred_check
          %p849 = pneg %p98
        $region38: #{tpu_custom_call.1} parent=27 // pred_check_branch
          %851 = sbr.rel (%p849) target = $region40
        $region39: #{tpu_custom_call.1} parent=27 // pred_region
          %s852 = smul.u32 4, %s28
          %s854 = ssub.s32 64, 64
          %855 = vsyncadd %s835, %s854
          %s856 = smul.addr %s852, 16
          %s857 = scalar_lea.hbm %s2, %s856
          %s859 = sshll.u32 %s838, 4
          %s860 = int_to_ptr.vmem [resolvable:$true] %s859
          %862 = dma.vmem_to_hbm [thread:$0]  %s860, 64, %s857, %s835
        $region40: #{tpu_custom_call.1} parent=27 // pred_fallthru
          _
        // Predicated region
        $region41: #{tpu_custom_call.1} parent=27 // pred_check
          %p863 = pneg %p124
        $region42: #{tpu_custom_call.1} parent=27 // pred_check_branch
          %865 = sbr.rel (%p863) target = $region44
        $region43: #{tpu_custom_call.1} parent=27 // pred_region
          %s866 = smul.u32 4, %s28
          %s868 = ssub.s32 64, 64
          %869 = vsyncadd %s840, %s868
          %s870 = smul.addr %s866, 16
          %s871 = scalar_lea.hbm %s3, %s870
          %s873 = sshll.u32 %s843, 4
          %s874 = int_to_ptr.vmem [resolvable:$true] %s873
          %876 = dma.vmem_to_hbm [thread:$0]  %s874, 64, %s871, %s840
        $region44: #{tpu_custom_call.1} parent=27 // pred_fallthru
          _
        // Predicated region
        $region45: #{tpu_custom_call.1} parent=27 // pred_check
          %p877 = pneg %p150
        $region46: #{tpu_custom_call.1} parent=27 // pred_check_branch
          %879 = sbr.rel (%p877) target = $region48
        $region47: #{tpu_custom_call.1} parent=27 // pred_region
          %s880 = smul.u32 4, %s28
          %s882 = ssub.s32 64, 64
          %883 = vsyncadd %s845, %s882
          %s884 = smul.addr %s880, 16
          %s885 = scalar_lea.hbm %s4, %s884
          %s887 = sshll.u32 %s848, 4
          %s888 = int_to_ptr.vmem [resolvable:$true] %s887
          %890 = dma.vmem_to_hbm [thread:$0]  %s888, 64, %s885, %s845
        $region48: #{tpu_custom_call.1} parent=27 // pred_fallthru
          _
      $region28: #{tpu_custom_call.1} parent=5 // pred_fallthru
        _
      %p891 = scmp.le.s32.totalorder 2, %s23
      // Predicated region
      $region49: #{tpu_custom_call.1} parent=5 // pred_check
        %p892 = pneg %p891
      $region50: #{tpu_custom_call.1} parent=5 // pred_check_branch
        %894 = sbr.rel (%p892) target = $region52
      $region51: #{tpu_custom_call.1} parent=5 // pred_region
        %s895 = ssub.s32 %s23, 2
        // Predicated region
        $region53: #{tpu_custom_call.1} parent=51 // pred_check
          %p896 = pneg %p104
        $region54: #{tpu_custom_call.1} parent=51 // pred_check_branch
          %898 = sbr.rel (%p896) target = $region56
        $region55: #{tpu_custom_call.1} parent=51 // pred_region
          %s899 = sand.u32 %s89, 1
          %s900 = scalar_lea.sflag [#allocation4], %s899
          %s901 = sand.u32 %s89, 1
          %s902 = smul.addr %s901, 4
          %s903 = scalar_lea.vmem [#allocation7], %s902
          %904 = dma.done %s900, 64
        $region56: #{tpu_custom_call.1} parent=51 // pred_fallthru
          _
        // Predicated region
        $region57: #{tpu_custom_call.1} parent=51 // pred_check
          %p905 = pneg %p130
        $region58: #{tpu_custom_call.1} parent=51 // pred_check_branch
          %907 = sbr.rel (%p905) target = $region60
        $region59: #{tpu_custom_call.1} parent=51 // pred_region
          %s908 = sand.u32 %s29, 1
          %s909 = scalar_lea.sflag [#allocation9], %s908
          %s910 = sand.u32 %s115, 1
          %s911 = smul.addr %s910, 4
          %s912 = scalar_lea.vmem [#allocation8], %s911
          %913 = dma.done %s909, 64
        $region60: #{tpu_custom_call.1} parent=51 // pred_fallthru
          _
        // Predicated region
        $region61: #{tpu_custom_call.1} parent=51 // pred_check
          %p914 = pneg %p156
        $region62: #{tpu_custom_call.1} parent=51 // pred_check_branch
          %916 = sbr.rel (%p914) target = $region64
        $region63: #{tpu_custom_call.1} parent=51 // pred_region
          %s917 = sand.u32 %s29, 1
          %s918 = scalar_lea.sflag [#allocation9], %s917
          %s919 = sand.u32 %s141, 1
          %s920 = smul.addr %s919, 4
          %s921 = scalar_lea.vmem [#allocation10], %s920
          %922 = dma.done %s918, 64
        $region64: #{tpu_custom_call.1} parent=51 // pred_fallthru
          _
      $region52: #{tpu_custom_call.1} parent=5 // pred_fallthru
        _
    $region6: #{tpu_custom_call.1} parent=1 // loop_footer
      %s27 = sadd.s32 1, %s23
    $region7: #{tpu_custom_call.1} parent=1 // loop_footer_branch
      %22 = sbr.rel target = $region3
    $region8: #{tpu_custom_call.1} parent=1 // loop_exit
      _
    %923 = vsyncpa [#allocation3], 1
    %s924 = scalar_lea.sflag [#allocation3], 1
    %925 = vsyncpa %s924, 1
    %926 = vsyncpa [#allocation6], 1
    %s927 = scalar_lea.sflag [#allocation6], 1
    %928 = vsyncpa %s927, 1
    %929 = vsyncpa [#allocation4], 1
    %s930 = scalar_lea.sflag [#allocation4], 1
    %931 = vsyncpa %s930, 1
    %932 = vsyncpa [#allocation9], 1
    %s933 = scalar_lea.sflag [#allocation9], 1
    %934 = vsyncpa %s933, 1

</llo_original>
